<compile_context>
chip_gen: v6e
topology: v6e:2x2x1
jax: 0.10.0
libtpu: 0.0.40
codegen_flags: <defaults>
</compile_context>

<pallas_src>
import math

import jax
import jax.numpy as jnp
from jax.experimental import pallas as pl
from jax.experimental.pallas import tpu as pltpu

MIN_VALUE = 1.0
MAX_VALUE = 2.0

_LANE = 128                       # vreg lane width
_MAX_WIDTH = 2048                 # lane-dense last-dim cap (multiple of 128)
_TILE_BYTES = 2 * 1024 * 1024     # ~2 MiB per block -> ~8 MiB double-buffered in+out


def _clamp_kernel(x_ref, o_ref):
    # clamp_min then clamp_max (matches torch.clamp_min -> torch.clamp_max,
    # including NaN propagation).
    o_ref[...] = jnp.minimum(jnp.maximum(x_ref[...], MIN_VALUE), MAX_VALUE)


def _pick_width(padded_total):
    """Largest multiple of 128 that divides padded_total, capped at _MAX_WIDTH."""
    k_max = min(_MAX_WIDTH // _LANE, padded_total // _LANE)
    for k in range(k_max, 0, -1):
        w = k * _LANE
        if padded_total % w == 0:
            return w
    return _LANE


def _clamp_pallas(x):
    """Tiled, lane-dense Pallas clamp(x, 1.0, 2.0) for arbitrary shapes."""
    orig_shape = x.shape
    dtype = x.dtype
    total = math.prod(orig_shape)
    itemsize = jnp.dtype(dtype).itemsize

    # Flatten; pad only if the element count is not a multiple of 128 so the
    # last dim is always lane-dense (no masked partial stores).
    flat = x.reshape(-1)
    padded_total = pl.cdiv(total, _LANE) * _LANE
    if padded_total != total:
        flat = jnp.pad(flat, (0, padded_total - total))

    width = _pick_width(padded_total)
    rows = padded_total // width

    # Rows per block: large lane-dense tiles, multiple-of-8 sublanes, sized to
    # stay well under the default scoped-VMEM limit once double-buffered.
    block_rows = max(8, (_TILE_BYTES // (width * itemsize)) // 8 * 8)
    if rows <= block_rows:
        block_rows = rows          # single block == full array dims (always legal)
    grid = (pl.cdiv(rows, block_rows),)

    x2d = flat.reshape(rows, width)

    out2d = pl.pallas_call(
        _clamp_kernel,
        out_shape=jax.ShapeDtypeStruct((rows, width), dtype),
        grid=grid,
        in_specs=[
            pl.BlockSpec((block_rows, width), lambda i: (i, 0),
                         memory_space=pltpu.MemorySpace.VMEM)
        ],
        out_specs=pl.BlockSpec((block_rows, width), lambda i: (i, 0),
                               memory_space=pltpu.MemorySpace.VMEM),
        input_output_aliases={0: 0},
        compiler_params=pltpu.CompilerParams(
            dimension_semantics=("parallel",)),
    )(x2d)

    out_flat = out2d.reshape(-1)
    if padded_total != total:
        out_flat = out_flat[:total]
    return out_flat.reshape(orig_shape)


def clamp_model(x, *, min_pallas_bytes=1 << 20):
    """Equivalent of Model.forward(x): clamp(x, 1.0, 2.0).

    Inputs smaller than ~1 MiB are dominated by custom-call launch / DMA-setup
    overhead, so they go through jnp.clip (XLA fuses it with neighbors);
    larger inputs take the tiled Pallas path.
    """
    if x.size * jnp.dtype(x.dtype).itemsize < min_pallas_bytes:
        return jnp.clip(x, MIN_VALUE, MAX_VALUE)
    return _clamp_pallas(x)


if __name__ == "__main__":
    key = jax.random.PRNGKey(0)
    # NCHW input, small shapes: batch=2, channels=4, spatial=16
    x = jax.random.uniform(
        key, (2, 4, 16, 16), dtype=jnp.float32, minval=0.0, maxval=3.0
    )

    ref = jnp.clip(x, MIN_VALUE, MAX_VALUE)

    # Exercise the Pallas kernel directly (even at the small demo shape).
    out_pallas = jax.block_until_ready(_clamp_pallas(x))
    assert out_pallas.shape == x.shape
    assert jnp.array_equal(out_pallas, ref), "pallas path mismatch vs reference"

    # Wrapper path (dispatches tiny inputs to fused XLA clip).
    out_model = jax.block_until_ready(clamp_model(x))
    assert jnp.array_equal(out_model, ref), "wrapper mismatch vs reference"

    print("KERNEL_OK")
</pallas_src>

<mosaic_0001>
module attributes {stable_mosaic.version = 11 : i64} {
  func.func @_clamp_kernel(%arg0: i32, %arg1: memref<1x2048xf32, #tpu.memory_space<vmem>>, %arg2: memref<1x2048xf32, #tpu.memory_space<vmem>>) attributes {dimension_semantics = [#tpu.dimension_semantics<parallel>], iteration_bounds = array<i64: 1>, scalar_prefetch = 0 : i64, scratch_operands = 0 : i64, tpu.core_type = #tpu.core_type<tc>, window_params = [{transform_indices = @transform_0, window_bounds = array<i64: 1, 2048>}, {transform_indices = @transform_1, window_bounds = array<i64: 1, 2048>}]} {
    %c0 = arith.constant 0 : index
    %c0_0 = arith.constant 0 : index
    %0 = vector.load %arg1[%c0, %c0_0] : memref<1x2048xf32, #tpu.memory_space<vmem>>, vector<1x2048xf32>
    %cst = arith.constant 1.000000e+00 : f32
    %1 = vector.broadcast %cst : f32 to vector<1x2048xf32>
    %2 = arith.maximumf %0, %1 : vector<1x2048xf32>
    %cst_1 = arith.constant 2.000000e+00 : f32
    %3 = vector.broadcast %cst_1 : f32 to vector<1x2048xf32>
    %4 = arith.minimumf %2, %3 : vector<1x2048xf32>
    %c0_2 = arith.constant 0 : index
    %c0_3 = arith.constant 0 : index
    %5 = vector.load %arg2[%c0_2, %c0_3] : memref<1x2048xf32, #tpu.memory_space<vmem>>, vector<1x2048xf32>
    tpu.vector_store %arg2[%c0_2, %c0_3], %4 {strides = array<i32>} : memref<1x2048xf32, #tpu.memory_space<vmem>>, vector<1x2048xf32>,
    return
  }
  func.func @transform_0(%arg0: i32) -> (i32, i32) {
    %c0_i32 = arith.constant 0 : i32
    %c0_i32_0 = arith.constant 0 : i32
    return %arg0, %c0_i32 : i32, i32
  }
  func.func @transform_1(%arg0: i32) -> (i32, i32) {
    %c0_i32 = arith.constant 0 : i32
    %c0_i32_0 = arith.constant 0 : i32
    return %arg0, %c0_i32 : i32, i32
  }
}

</mosaic_0001>

<llo_original>
// kernel: tpu_custom_call.1
$region0: #{tpu_custom_call.1}
  #allocation0 [shape = 'u32[]', space=smem, size = 0x4, offset = 0x4, fixed_abs, tag = 'smem constant byte address 0x4 - core index']
  #allocation1 [shape = 'u32[144,128]{1,0:T(1,128)}', space=vmem, size = 0x12000, scoped, tag = 'internal scratch']
  %s0 = inlined_call_operand.hbm [shape: f32[1,2048], index: 0, kind: input, shape index: {}, may-alias: {0,1}]
  %s1 = inlined_call_operand.hbm [shape: f32[1,2048], index: 1, kind: output, shape index: {}, may-alias: {0,1}]
  %s2 = sld [smem:[#allocation0]]
  $region18: #{tpu_custom_call.1} parent=0
    _
  %s4 = ssub.s32 1, %s2
  %s5 = scalar_select 0, %s4, %s2
  $region1: #{tpu_custom_call.1} parent=0
    #allocation2 [shape = 'u8[8192]{0}', space=vmem, size = 0x2000, scoped, tag = 'input window, operand 0, single buffered']
    #allocation3 [shape = 's32[1]{0}', space=sflag, size = 0x4, scoped, tag = 'scoped memory for tpu_custom_call.1']
    #allocation4 [shape = 's32[1]{0}', space=sflag, size = 0x4, scoped, tag = 'scoped memory for tpu_custom_call.1']
    #allocation5 [shape = 'u8[8192]{0}', space=vmem, size = 0x2000, scoped, tag = 'output window, operand 0, single buffered']
    %6 = vsyncpa [#allocation3], 0
    %7 = vsyncpa [#allocation4], 0
    // Predicated region
    $region2: #{tpu_custom_call.1} parent=1 // pred_check
      _
    $region3: #{tpu_custom_call.1} parent=1 // pred_check_branch
      %9 = sbr.rel (0) target = $region5
    $region4: #{tpu_custom_call.1} parent=1 // pred_region
      %s11 = ssub.s32 256, 256
      %12 = vsyncadd [#allocation3], %s11
      %s14 = sshll.u32 [#allocation2], 4
      %s15 = int_to_ptr.vmem [resolvable:$true] %s14
      %17 = dma.hbm_to_vmem [thread:$0]  %s0, 256, %s15, [#allocation3]
    $region5: #{tpu_custom_call.1} parent=1 // pred_fallthru
      _
    // Predicated region
    $region6: #{tpu_custom_call.1} parent=1 // pred_check
      _
    $region7: #{tpu_custom_call.1} parent=1 // pred_check_branch
      %19 = sbr.rel (0) target = $region9
    $region8: #{tpu_custom_call.1} parent=1 // pred_region
      %20 = dma.done [#allocation3], 256
    $region9: #{tpu_custom_call.1} parent=1 // pred_fallthru
      _
    %v21 = vld [vmem:[#allocation2] sm:$0xff]
    %v22 = vld [vmem:[#allocation2 + $0x8] sm:$0xff]
    %v23 = vmax.f32 %v21, 1.0
    %v24 = vmax.f32 %v22, 1.0
    %v25 = vmin.f32 %v23, 2.0
    %v26 = vmin.f32 %v24, 2.0
    %27 = vst [vmem:[#allocation5] sm:$0xff] %v25
    %28 = vst [vmem:[#allocation5 + $0x8] sm:$0xff] %v26
    // Predicated region
    $region10: #{tpu_custom_call.1} parent=1 // pred_check
      _
    $region11: #{tpu_custom_call.1} parent=1 // pred_check_branch
      %30 = sbr.rel (0) target = $region13
    $region12: #{tpu_custom_call.1} parent=1 // pred_region
      %s32 = ssub.s32 256, 256
      %33 = vsyncadd [#allocation4], %s32
      %s35 = sshll.u32 [#allocation5], 4
      %s36 = int_to_ptr.vmem [resolvable:$true] %s35
      %38 = dma.vmem_to_hbm [thread:$0]  %s36, 256, %s1, [#allocation4]
    $region13: #{tpu_custom_call.1} parent=1 // pred_fallthru
      _
    // Predicated region
    $region14: #{tpu_custom_call.1} parent=1 // pred_check
      _
    $region15: #{tpu_custom_call.1} parent=1 // pred_check_branch
      %40 = sbr.rel (0) target = $region17
    $region16: #{tpu_custom_call.1} parent=1 // pred_region
      %41 = dma.done [#allocation4], 256
    $region17: #{tpu_custom_call.1} parent=1 // pred_fallthru
      _
    %42 = vsyncpa [#allocation3], 1
    %43 = vsyncpa [#allocation4], 1

</llo_original>
